<compile_context>
chip_gen: v7x
topology: tpu7x:2x2x1
jax: 0.10.0
libtpu: 0.0.40
codegen_flags: <defaults>
</compile_context>

<pallas_src>
import jax
import jax.numpy as jnp
from jax import lax
from jax.experimental import pallas as pl
from jax.experimental.pallas import tpu as pltpu


# ----------------------------------------------------------------------------- kernel

def graph_encoder_kernel(x_ref, src_ref, dst_ref, ew_ref, b1n_ref, bn1_ref,
                         lin_wt_ref, lin_b_ref, alpha_ref, gamma_ref, beta_ref,
                         o_ref):
    # x_ref      : (N, Cin)      node features
    # src_ref    : (E, 1) int32  edge sources   (edge_index[0])
    # dst_ref    : (1, E) int32  edge targets   (edge_index[1])
    # ew_ref     : (1, E) f32    edge weights
    # b1n_ref    : (1, N) int32  node -> graph assignment (row layout, for mean-pool mask)
    # bn1_ref    : (N, 1) int32  node -> graph assignment (column layout, for max-pool mask)
    # lin_wt_ref : (Cin, Cout)   SGConv Linear weight, pre-transposed
    # lin_b_ref, alpha_ref, gamma_ref, beta_ref : (1, Cout)
    # o_ref      : (G, 2*Cout)   [ global_mean_pool | global_max_pool ]
    N, _ = x_ref.shape
    E = ew_ref.shape[1]
    G = o_ref.shape[0]
    f32 = jnp.float32

    # -- densify the graph in VMEM: adj[d, s] = sum of weights of edges s->d, plus self loops --
    node_ne = lax.broadcasted_iota(jnp.int32, (N, E), 0)
    onehot_dst = (node_ne == dst_ref[...]).astype(f32)                  # (N, E)
    node_en = lax.broadcasted_iota(jnp.int32, (E, N), 1)
    onehot_src_t = (node_en == src_ref[...]).astype(f32)                # (E, N)
    adj = jnp.dot(onehot_dst * ew_ref[...], onehot_src_t,
                  preferred_element_type=f32)                           # (N, N)
    eye = (lax.broadcasted_iota(jnp.int32, (N, N), 0)
           == lax.broadcasted_iota(jnp.int32, (N, N), 1)).astype(f32)
    adj = adj + eye                                                     # self loops, weight 1.0

    # -- gcn_norm degrees (aggregation side); S = D^-1/2 (A+I) D^-1/2 applied by operand scaling --
    deg = jnp.sum(adj, axis=1, keepdims=True)                           # (N, 1)
    dinv = jnp.where(deg > 0, lax.rsqrt(deg), 0.0)                      # (N, 1)

    # -- SGConv: K=2 propagations (statically unrolled), then Linear --
    h = x_ref[...]
    for _ in range(2):                                                  # h <- S @ h, no transposes
        h = dinv * h
        h = jnp.dot(adj, h, preferred_element_type=f32)
        h = dinv * h
    z = jnp.dot(h, lin_wt_ref[...], preferred_element_type=f32) + lin_b_ref[...]   # (N, Cout)

    # -- PReLU (per-channel slope) --
    z = jnp.where(z > 0, z, alpha_ref[...] * z)

    # -- BatchNorm1d: training-mode batch statistics, biased variance, eps=1e-5 --
    mu = jnp.mean(z, axis=0, keepdims=True)
    var = jnp.mean((z - mu) * (z - mu), axis=0, keepdims=True)
    y = (z - mu) * lax.rsqrt(var + 1e-5) * gamma_ref[...] + beta_ref[...]          # (N, Cout)

    # -- global_mean_pool: one (G,N)x(N,Cout) MXU matmul over the graph-membership mask --
    mask = (lax.broadcasted_iota(jnp.int32, (G, N), 0) == b1n_ref[...]).astype(f32)   # (G, N)
    counts = jnp.maximum(jnp.sum(mask, axis=1, keepdims=True), 1.0)                   # (G, 1)
    mean_pool = jnp.dot(mask, y, preferred_element_type=f32) / counts                 # (G, Cout)

    # -- global_max_pool: static per-graph loop, 2D masked maxes only (G is small & static) --
    neg = jnp.finfo(f32).min
    rows = []
    for g in range(G):
        in_g = bn1_ref[...] == g                                                      # (N, 1)
        rows.append(jnp.max(jnp.where(in_g, y, neg), axis=0, keepdims=True))          # (1, Cout)
    max_pool = jnp.concatenate(rows, axis=0)                                          # (G, Cout)

    # single full-tile store of the output block
    o_ref[...] = jnp.concatenate([mean_pool, max_pool], axis=1)


# ----------------------------------------------------------------------------- wrappers

def _vmem():
    return pl.BlockSpec(memory_space=pltpu.MemorySpace.VMEM)


def prepare_params(raw):
    """One-time parameter layout prep (hoisted out of the per-call forward path)."""
    return {
        'lin_w_t': jnp.asarray(raw['lin_w'], jnp.float32).T,            # (Cin, Cout)
        'lin_b':   jnp.asarray(raw['lin_b'], jnp.float32).reshape(1, -1),
        'alpha':   jnp.asarray(raw['prelu_alpha'], jnp.float32).reshape(1, -1),
        'gamma':   jnp.asarray(raw['bn_gamma'], jnp.float32).reshape(1, -1),
        'beta':    jnp.asarray(raw['bn_beta'], jnp.float32).reshape(1, -1),
    }


def graph_encoder_forward(x, edge_index, edge_weight, batch, num_graphs, params):
    """x: (N, Cin); edge_index: (2, E) int; edge_weight: (E,); batch: (N,) int."""
    N, _ = x.shape
    E = edge_index.shape[1]
    Cout = params['lin_w_t'].shape[1]
    src_e1 = edge_index[0].reshape(E, 1).astype(jnp.int32)
    dst_1e = edge_index[1].reshape(1, E).astype(jnp.int32)
    ew_1e = edge_weight.reshape(1, E).astype(jnp.float32)
    batch_1n = batch.reshape(1, N).astype(jnp.int32)
    batch_n1 = batch.reshape(N, 1).astype(jnp.int32)
    return pl.pallas_call(
        graph_encoder_kernel,
        out_shape=jax.ShapeDtypeStruct((num_graphs, 2 * Cout), jnp.float32),
        in_specs=[_vmem() for _ in range(11)],
        out_specs=_vmem(),
    )(x.astype(jnp.float32), src_e1, dst_1e, ew_1e, batch_1n, batch_n1,
      params['lin_w_t'], params['lin_b'], params['alpha'],
      params['gamma'], params['beta'])


# ----------------------------------------------------------------------------- pure-JAX reference

def graph_encoder_reference(x, edge_index, edge_weight, batch, num_graphs, params):
    hp = lax.Precision.HIGHEST
    N = x.shape[0]
    src, dst = edge_index[0], edge_index[1]
    adj = jnp.zeros((N, N), jnp.float32).at[dst, src].add(edge_weight)
    adj = adj + jnp.eye(N, dtype=jnp.float32)
    deg = jnp.sum(adj, axis=1)
    dinv = jnp.where(deg > 0, 1.0 / jnp.sqrt(deg), 0.0)
    s_mat = dinv[:, None] * adj * dinv[None, :]
    h = jnp.dot(s_mat, jnp.dot(s_mat, x, precision=hp), precision=hp)
    z = jnp.dot(h, params['lin_w_t'], precision=hp) + params['lin_b']
    z = jnp.where(z > 0, z, params['alpha'] * z)
    mu = z.mean(axis=0, keepdims=True)
    var = ((z - mu) ** 2).mean(axis=0, keepdims=True)
    y = (z - mu) / jnp.sqrt(var + 1e-5) * params['gamma'] + params['beta']
    mask = (jnp.arange(num_graphs)[:, None] == batch[None, :]).astype(jnp.float32)
    counts = jnp.maximum(mask.sum(axis=1, keepdims=True), 1.0)
    mean_pool = jnp.dot(mask, y, precision=hp) / counts
    neg = jnp.finfo(jnp.float32).min
    max_pool = jnp.max(jnp.where(mask[:, :, None] > 0.5, y[None, :, :], neg), axis=1)
    return jnp.concatenate([mean_pool, max_pool], axis=1)


# ----------------------------------------------------------------------------- main

if __name__ == "__main__":
    key = jax.random.PRNGKey(0)
    N, E, CIN, COUT, G = 32, 64, 16, 32, 4          # 4 graphs x 8 nodes each
    P = N // G
    ks = jax.random.split(key, 10)

    x = jax.random.normal(ks[0], (N, CIN), jnp.float32)

    # random intra-graph edges without self loops (see TODO on add_remaining_self_loops)
    src = jax.random.randint(ks[1], (E,), 0, N, jnp.int32)
    off = jax.random.randint(ks[2], (E,), 1, P, jnp.int32)
    dst = (src // P) * P + (src % P + off) % P
    edge_index = jnp.stack([src, dst], axis=0)
    edge_weight = jax.random.uniform(ks[3], (E,), jnp.float32, 0.1, 1.0)
    batch = jnp.repeat(jnp.arange(G, dtype=jnp.int32), P)

    s = 1.0 / float(CIN) ** 0.5
    raw_params = {
        'lin_w': jax.random.uniform(ks[4], (COUT, CIN), jnp.float32, -s, s),  # torch Linear layout
        'lin_b': jax.random.uniform(ks[5], (COUT,), jnp.float32, -s, s),
        'prelu_alpha': jnp.full((COUT,), 0.25, jnp.float32),                  # PReLU default init
        'bn_gamma': 1.0 + 0.1 * jax.random.normal(ks[6], (COUT,), jnp.float32),
        'bn_beta': 0.1 * jax.random.normal(ks[7], (COUT,), jnp.float32),
    }
    params = prepare_params(raw_params)   # one-time layout prep, hoisted out of the call path

    out = graph_encoder_forward(x, edge_index, edge_weight, batch, G, params)
    out = jax.block_until_ready(out)

    ref = graph_encoder_reference(x, edge_index, edge_weight, batch, G, params)
    assert out.shape == (G, 2 * COUT), out.shape
    assert bool(jnp.all(jnp.isfinite(out)))
    assert bool(jnp.allclose(out, ref, atol=2e-3, rtol=2e-3)), \
        float(jnp.max(jnp.abs(out - ref)))
    print("KERNEL_OK")
</pallas_src>

<mosaic_0001>
module attributes {stable_mosaic.version = 11 : i64} {
  func.func @graph_encoder_kernel(%arg0: memref<32x16xf32, #tpu.memory_space<vmem>>, %arg1: memref<64x1xi32, #tpu.memory_space<vmem>>, %arg2: memref<1x64xi32, #tpu.memory_space<vmem>>, %arg3: memref<1x64xf32, #tpu.memory_space<vmem>>, %arg4: memref<1x32xi32, #tpu.memory_space<vmem>>, %arg5: memref<32x1xi32, #tpu.memory_space<vmem>>, %arg6: memref<16x32xf32, #tpu.memory_space<vmem>>, %arg7: memref<1x32xf32, #tpu.memory_space<vmem>>, %arg8: memref<1x32xf32, #tpu.memory_space<vmem>>, %arg9: memref<1x32xf32, #tpu.memory_space<vmem>>, %arg10: memref<1x32xf32, #tpu.memory_space<vmem>>, %arg11: memref<4x64xf32, #tpu.memory_space<vmem>>) attributes {dimension_semantics = [], scalar_prefetch = 0 : i64, scratch_operands = 0 : i64, tpu.core_type = #tpu.core_type<tc>} {
    %0 = tpu.iota {dimensions = array<i32: 0>} : vector<32x64xi32>
    %c0 = arith.constant 0 : index
    %c0_0 = arith.constant 0 : index
    %1 = vector.load %arg2[%c0, %c0_0] : memref<1x64xi32, #tpu.memory_space<vmem>>, vector<1x64xi32>
    %2 = vector.broadcast %1 : vector<1x64xi32> to vector<32x64xi32>
    %3 = arith.cmpi eq, %0, %2 : vector<32x64xi32>
    %4 = arith.extui %3 : vector<32x64xi1> to vector<32x64xi32>
    %5 = arith.sitofp %4 : vector<32x64xi32> to vector<32x64xf32>
    %6 = tpu.iota {dimensions = array<i32: 1>} : vector<64x32xi32>
    %c0_1 = arith.constant 0 : index
    %c0_2 = arith.constant 0 : index
    %7 = vector.load %arg1[%c0_1, %c0_2] : memref<64x1xi32, #tpu.memory_space<vmem>>, vector<64x1xi32>
    %8 = vector.broadcast %7 : vector<64x1xi32> to vector<64x32xi32>
    %9 = arith.cmpi eq, %6, %8 : vector<64x32xi32>
    %10 = arith.extui %9 : vector<64x32xi1> to vector<64x32xi32>
    %11 = arith.sitofp %10 : vector<64x32xi32> to vector<64x32xf32>
    %c0_3 = arith.constant 0 : index
    %c0_4 = arith.constant 0 : index
    %12 = vector.load %arg3[%c0_3, %c0_4] : memref<1x64xf32, #tpu.memory_space<vmem>>, vector<1x64xf32>
    %13 = vector.broadcast %12 : vector<1x64xf32> to vector<32x64xf32>
    %14 = arith.mulf %5, %13 : vector<32x64xf32>
    %cst = arith.constant dense<0.000000e+00> : vector<32x32xf32>
    %15 = tpu.matmul %14, %11, %cst {dimension_numbers = #tpu.dot_dimension_numbers<[1], [0], [0], [1], [0, 0, 1, 1], [], []>} : vector<32x64xf32>, vector<64x32xf32>, vector<32x32xf32> -> vector<32x32xf32>
    %16 = tpu.iota {dimensions = array<i32: 0>} : vector<32x32xi32>
    %17 = tpu.iota {dimensions = array<i32: 1>} : vector<32x32xi32>
    %18 = arith.cmpi eq, %16, %17 : vector<32x32xi32>
    %19 = arith.extui %18 : vector<32x32xi1> to vector<32x32xi32>
    %20 = arith.sitofp %19 : vector<32x32xi32> to vector<32x32xf32>
    %21 = arith.addf %15, %20 : vector<32x32xf32>
    %cst_5 = arith.constant dense<0.000000e+00> : vector<32xf32>
    %22 = vector.multi_reduction <add>, %21, %cst_5 [1] : vector<32x32xf32> to vector<32xf32>
    %23 = vector.shape_cast %22 : vector<32xf32> to vector<32x1xf32>
    %cst_6 = arith.constant 0.000000e+00 : f32
    %24 = vector.broadcast %cst_6 : f32 to vector<32x1xf32>
    %25 = arith.cmpf ogt, %23, %24 : vector<32x1xf32>
    %26 = math.rsqrt %23 : vector<32x1xf32>
    %cst_7 = arith.constant 0.000000e+00 : f32
    %27 = vector.broadcast %cst_7 : f32 to vector<32x1xf32>
    %28 = arith.select %25, %26, %27 : vector<32x1xi1>, vector<32x1xf32>
    %c0_8 = arith.constant 0 : index
    %c0_9 = arith.constant 0 : index
    %29 = vector.load %arg0[%c0_8, %c0_9] : memref<32x16xf32, #tpu.memory_space<vmem>>, vector<32x16xf32>
    %30 = vector.broadcast %28 : vector<32x1xf32> to vector<32x16xf32>
    %31 = arith.mulf %30, %29 : vector<32x16xf32>
    %cst_10 = arith.constant dense<0.000000e+00> : vector<32x16xf32>
    %32 = tpu.matmul %21, %31, %cst_10 {dimension_numbers = #tpu.dot_dimension_numbers<[1], [0], [0], [1], [0, 0, 1, 1], [], []>} : vector<32x32xf32>, vector<32x16xf32>, vector<32x16xf32> -> vector<32x16xf32>
    %33 = vector.broadcast %28 : vector<32x1xf32> to vector<32x16xf32>
    %34 = arith.mulf %33, %32 : vector<32x16xf32>
    %35 = vector.broadcast %28 : vector<32x1xf32> to vector<32x16xf32>
    %36 = arith.mulf %35, %34 : vector<32x16xf32>
    %cst_11 = arith.constant dense<0.000000e+00> : vector<32x16xf32>
    %37 = tpu.matmul %21, %36, %cst_11 {dimension_numbers = #tpu.dot_dimension_numbers<[1], [0], [0], [1], [0, 0, 1, 1], [], []>} : vector<32x32xf32>, vector<32x16xf32>, vector<32x16xf32> -> vector<32x16xf32>
    %38 = vector.broadcast %28 : vector<32x1xf32> to vector<32x16xf32>
    %39 = arith.mulf %38, %37 : vector<32x16xf32>
    %c0_12 = arith.constant 0 : index
    %c0_13 = arith.constant 0 : index
    %40 = vector.load %arg6[%c0_12, %c0_13] : memref<16x32xf32, #tpu.memory_space<vmem>>, vector<16x32xf32>
    %cst_14 = arith.constant dense<0.000000e+00> : vector<32x32xf32>
    %41 = tpu.matmul %39, %40, %cst_14 {dimension_numbers = #tpu.dot_dimension_numbers<[1], [0], [0], [1], [0, 0, 1, 1], [], []>} : vector<32x16xf32>, vector<16x32xf32>, vector<32x32xf32> -> vector<32x32xf32>
    %c0_15 = arith.constant 0 : index
    %c0_16 = arith.constant 0 : index
    %42 = vector.load %arg7[%c0_15, %c0_16] : memref<1x32xf32, #tpu.memory_space<vmem>>, vector<1x32xf32>
    %43 = vector.broadcast %42 : vector<1x32xf32> to vector<32x32xf32>
    %44 = arith.addf %41, %43 : vector<32x32xf32>
    %cst_17 = arith.constant 0.000000e+00 : f32
    %45 = vector.broadcast %cst_17 : f32 to vector<32x32xf32>
    %46 = arith.cmpf ogt, %44, %45 : vector<32x32xf32>
    %c0_18 = arith.constant 0 : index
    %c0_19 = arith.constant 0 : index
    %47 = vector.load %arg8[%c0_18, %c0_19] : memref<1x32xf32, #tpu.memory_space<vmem>>, vector<1x32xf32>
    %48 = vector.broadcast %47 : vector<1x32xf32> to vector<32x32xf32>
    %49 = arith.mulf %48, %44 : vector<32x32xf32>
    %50 = arith.select %46, %44, %49 : vector<32x32xi1>, vector<32x32xf32>
    %cst_20 = arith.constant dense<0.000000e+00> : vector<32xf32>
    %51 = vector.multi_reduction <add>, %50, %cst_20 [0] : vector<32x32xf32> to vector<32xf32>
    %52 = vector.shape_cast %51 : vector<32xf32> to vector<1x32xf32>
    %cst_21 = arith.constant 3.200000e+01 : f32
    %53 = vector.broadcast %cst_21 : f32 to vector<1x32xf32>
    %54 = arith.divf %52, %53 : vector<1x32xf32>
    %55 = vector.broadcast %54 : vector<1x32xf32> to vector<32x32xf32>
    %56 = arith.subf %50, %55 : vector<32x32xf32>
    %57 = vector.broadcast %54 : vector<1x32xf32> to vector<32x32xf32>
    %58 = arith.subf %50, %57 : vector<32x32xf32>
    %59 = arith.mulf %56, %58 : vector<32x32xf32>
    %cst_22 = arith.constant dense<0.000000e+00> : vector<32xf32>
    %60 = vector.multi_reduction <add>, %59, %cst_22 [0] : vector<32x32xf32> to vector<32xf32>
    %61 = vector.shape_cast %60 : vector<32xf32> to vector<1x32xf32>
    %cst_23 = arith.constant 3.200000e+01 : f32
    %62 = vector.broadcast %cst_23 : f32 to vector<1x32xf32>
    %63 = arith.divf %61, %62 : vector<1x32xf32>
    %64 = vector.broadcast %54 : vector<1x32xf32> to vector<32x32xf32>
    %65 = arith.subf %50, %64 : vector<32x32xf32>
    %cst_24 = arith.constant 9.99999974E-6 : f32
    %66 = vector.broadcast %cst_24 : f32 to vector<1x32xf32>
    %67 = arith.addf %63, %66 : vector<1x32xf32>
    %68 = math.rsqrt %67 : vector<1x32xf32>
    %69 = vector.broadcast %68 : vector<1x32xf32> to vector<32x32xf32>
    %70 = arith.mulf %65, %69 : vector<32x32xf32>
    %c0_25 = arith.constant 0 : index
    %c0_26 = arith.constant 0 : index
    %71 = vector.load %arg9[%c0_25, %c0_26] : memref<1x32xf32, #tpu.memory_space<vmem>>, vector<1x32xf32>
    %72 = vector.broadcast %71 : vector<1x32xf32> to vector<32x32xf32>
    %73 = arith.mulf %70, %72 : vector<32x32xf32>
    %c0_27 = arith.constant 0 : index
    %c0_28 = arith.constant 0 : index
    %74 = vector.load %arg10[%c0_27, %c0_28] : memref<1x32xf32, #tpu.memory_space<vmem>>, vector<1x32xf32>
    %75 = vector.broadcast %74 : vector<1x32xf32> to vector<32x32xf32>
    %76 = arith.addf %73, %75 : vector<32x32xf32>
    %77 = tpu.iota {dimensions = array<i32: 0>} : vector<4x32xi32>
    %c0_29 = arith.constant 0 : index
    %c0_30 = arith.constant 0 : index
    %78 = vector.load %arg4[%c0_29, %c0_30] : memref<1x32xi32, #tpu.memory_space<vmem>>, vector<1x32xi32>
    %79 = vector.broadcast %78 : vector<1x32xi32> to vector<4x32xi32>
    %80 = arith.cmpi eq, %77, %79 : vector<4x32xi32>
    %81 = arith.extui %80 : vector<4x32xi1> to vector<4x32xi32>
    %82 = arith.sitofp %81 : vector<4x32xi32> to vector<4x32xf32>
    %cst_31 = arith.constant dense<0.000000e+00> : vector<4xf32>
    %83 = vector.multi_reduction <add>, %82, %cst_31 [1] : vector<4x32xf32> to vector<4xf32>
    %84 = vector.shape_cast %83 : vector<4xf32> to vector<4x1xf32>
    %cst_32 = arith.constant 1.000000e+00 : f32
    %85 = vector.broadcast %cst_32 : f32 to vector<4x1xf32>
    %86 = arith.maximumf %84, %85 : vector<4x1xf32>
    %cst_33 = arith.constant dense<0.000000e+00> : vector<4x32xf32>
    %87 = tpu.matmul %82, %76, %cst_33 {dimension_numbers = #tpu.dot_dimension_numbers<[1], [0], [0], [1], [0, 0, 1, 1], [], []>} : vector<4x32xf32>, vector<32x32xf32>, vector<4x32xf32> -> vector<4x32xf32>
    %88 = vector.broadcast %86 : vector<4x1xf32> to vector<4x32xf32>
    %89 = arith.divf %87, %88 : vector<4x32xf32>
    %c0_34 = arith.constant 0 : index
    %c0_35 = arith.constant 0 : index
    %90 = vector.load %arg5[%c0_34, %c0_35] : memref<32x1xi32, #tpu.memory_space<vmem>>, vector<32x1xi32>
    %c0_i32 = arith.constant 0 : i32
    %91 = vector.broadcast %c0_i32 : i32 to vector<32x1xi32>
    %92 = arith.cmpi eq, %90, %91 : vector<32x1xi32>
    %cst_36 = arith.constant -3.40282347E+38 : f32
    %93 = vector.shape_cast %92 : vector<32x1xi1> to vector<32x1xi1>
    %94 = vector.broadcast %93 : vector<32x1xi1> to vector<32x32xi1>
    %95 = vector.broadcast %cst_36 : f32 to vector<32x32xf32>
    %96 = arith.select %94, %76, %95 : vector<32x32xi1>, vector<32x32xf32>
    %cst_37 = arith.constant dense<0xFF800000> : vector<32xf32>
    %97 = vector.multi_reduction <maximumf>, %96, %cst_37 [0] : vector<32x32xf32> to vector<32xf32>
    %98 = vector.shape_cast %97 : vector<32xf32> to vector<1x32xf32>
    %c0_38 = arith.constant 0 : index
    %c0_39 = arith.constant 0 : index
    %99 = vector.load %arg5[%c0_38, %c0_39] : memref<32x1xi32, #tpu.memory_space<vmem>>, vector<32x1xi32>
    %c1_i32 = arith.constant 1 : i32
    %100 = vector.broadcast %c1_i32 : i32 to vector<32x1xi32>
    %101 = arith.cmpi eq, %99, %100 : vector<32x1xi32>
    %cst_40 = arith.constant -3.40282347E+38 : f32
    %102 = vector.shape_cast %101 : vector<32x1xi1> to vector<32x1xi1>
    %103 = vector.broadcast %102 : vector<32x1xi1> to vector<32x32xi1>
    %104 = vector.broadcast %cst_40 : f32 to vector<32x32xf32>
    %105 = arith.select %103, %76, %104 : vector<32x32xi1>, vector<32x32xf32>
    %cst_41 = arith.constant dense<0xFF800000> : vector<32xf32>
    %106 = vector.multi_reduction <maximumf>, %105, %cst_41 [0] : vector<32x32xf32> to vector<32xf32>
    %107 = vector.shape_cast %106 : vector<32xf32> to vector<1x32xf32>
    %c0_42 = arith.constant 0 : index
    %c0_43 = arith.constant 0 : index
    %108 = vector.load %arg5[%c0_42, %c0_43] : memref<32x1xi32, #tpu.memory_space<vmem>>, vector<32x1xi32>
    %c2_i32 = arith.constant 2 : i32
    %109 = vector.broadcast %c2_i32 : i32 to vector<32x1xi32>
    %110 = arith.cmpi eq, %108, %109 : vector<32x1xi32>
    %cst_44 = arith.constant -3.40282347E+38 : f32
    %111 = vector.shape_cast %110 : vector<32x1xi1> to vector<32x1xi1>
    %112 = vector.broadcast %111 : vector<32x1xi1> to vector<32x32xi1>
    %113 = vector.broadcast %cst_44 : f32 to vector<32x32xf32>
    %114 = arith.select %112, %76, %113 : vector<32x32xi1>, vector<32x32xf32>
    %cst_45 = arith.constant dense<0xFF800000> : vector<32xf32>
    %115 = vector.multi_reduction <maximumf>, %114, %cst_45 [0] : vector<32x32xf32> to vector<32xf32>
    %116 = vector.shape_cast %115 : vector<32xf32> to vector<1x32xf32>
    %c0_46 = arith.constant 0 : index
    %c0_47 = arith.constant 0 : index
    %117 = vector.load %arg5[%c0_46, %c0_47] : memref<32x1xi32, #tpu.memory_space<vmem>>, vector<32x1xi32>
    %c3_i32 = arith.constant 3 : i32
    %118 = vector.broadcast %c3_i32 : i32 to vector<32x1xi32>
    %119 = arith.cmpi eq, %117, %118 : vector<32x1xi32>
    %cst_48 = arith.constant -3.40282347E+38 : f32
    %120 = vector.shape_cast %119 : vector<32x1xi1> to vector<32x1xi1>
    %121 = vector.broadcast %120 : vector<32x1xi1> to vector<32x32xi1>
    %122 = vector.broadcast %cst_48 : f32 to vector<32x32xf32>
    %123 = arith.select %121, %76, %122 : vector<32x32xi1>, vector<32x32xf32>
    %cst_49 = arith.constant dense<0xFF800000> : vector<32xf32>
    %124 = vector.multi_reduction <maximumf>, %123, %cst_49 [0] : vector<32x32xf32> to vector<32xf32>
    %125 = vector.shape_cast %124 : vector<32xf32> to vector<1x32xf32>
    %126 = tpu.concatenate %98, %107, %116, %125 in 0 : vector<1x32xf32>, vector<1x32xf32>, vector<1x32xf32>, vector<1x32xf32> -> vector<4x32xf32>
    %127 = tpu.concatenate %89, %126 in 1 : vector<4x32xf32>, vector<4x32xf32> -> vector<4x64xf32>
    %c0_50 = arith.constant 0 : index
    %c0_51 = arith.constant 0 : index
    %128 = vector.load %arg11[%c0_50, %c0_51] : memref<4x64xf32, #tpu.memory_space<vmem>>, vector<4x64xf32>
    tpu.vector_store %arg11[%c0_50, %c0_51], %127 {strides = array<i32>} : memref<4x64xf32, #tpu.memory_space<vmem>>, vector<4x64xf32>,
    return
  }
}

</mosaic_0001>

<llo_original>
// kernel: tpu_custom_call.1
$region0: #{tpu_custom_call.1}
  #allocation0 [shape = 'u32[]', space=smem, size = 0x4, offset = 0x4, fixed_abs, tag = 'smem constant byte address 0x4 - core index']
  #allocation1 [shape = 'u32[144,128]{1,0:T(1,128)}', space=vmem, size = 0x12000, scoped, tag = 'internal scratch']
  %s0 = inlined_call_operand.vmem [shape: f32[32,16], index: 0, kind: input, shape index: {}]
  %s1 = inlined_call_operand.vmem [shape: s32[64,1], index: 1, kind: input, shape index: {}]
  %s2 = inlined_call_operand.vmem [shape: s32[1,64], index: 2, kind: input, shape index: {}]
  %s3 = inlined_call_operand.vmem [shape: f32[1,64], index: 3, kind: input, shape index: {}]
  %s4 = inlined_call_operand.vmem [shape: s32[1,32], index: 4, kind: input, shape index: {}]
  %s5 = inlined_call_operand.vmem [shape: s32[32,1], index: 5, kind: input, shape index: {}]
  %s6 = inlined_call_operand.vmem [shape: f32[16,32], index: 6, kind: input, shape index: {}]
  %s7 = inlined_call_operand.vmem [shape: f32[1,32], index: 7, kind: input, shape index: {}]
  %s8 = inlined_call_operand.vmem [shape: f32[1,32], index: 8, kind: input, shape index: {}]
  %s9 = inlined_call_operand.vmem [shape: f32[1,32], index: 9, kind: input, shape index: {}]
  %s10 = inlined_call_operand.vmem [shape: f32[1,32], index: 10, kind: input, shape index: {}]
  %s11 = inlined_call_operand.hbm [shape: f32[4,64], index: 11, kind: output, shape index: {}]
  %s12 = sld [smem:[#allocation0]]
  $region54: #{tpu_custom_call.1} parent=0
    _
  %s14 = ssub.s32 1, %s12
  %s15 = scalar_select 0, %s14, %s12
  $region1: #{tpu_custom_call.1} parent=0
    #allocation2 [shape = 'u8[2048]{0}', space=vmem, size = 0x800, scoped, tag = 'output window, operand 0, single buffered']
    #allocation3 [shape = 's32[1]{0}', space=sflag, size = 0x4, scoped, tag = 'scoped memory for tpu_custom_call.1']
    %16 = vsyncpa [#allocation3], 0
    // Predicated region
    $region2: #{tpu_custom_call.1} parent=1 // pred_check
      _
    $region3: #{tpu_custom_call.1} parent=1 // pred_check_branch
      %18 = sbr.rel (0) target = $region5
    $region4: #{tpu_custom_call.1} parent=1 // pred_region
      _
    $region5: #{tpu_custom_call.1} parent=1 // pred_fallthru
      _
    // Predicated region
    $region6: #{tpu_custom_call.1} parent=1 // pred_check
      _
    $region7: #{tpu_custom_call.1} parent=1 // pred_check_branch
      %20 = sbr.rel (0) target = $region9
    $region8: #{tpu_custom_call.1} parent=1 // pred_region
      _
    $region9: #{tpu_custom_call.1} parent=1 // pred_fallthru
      _
    // Predicated region
    $region10: #{tpu_custom_call.1} parent=1 // pred_check
      _
    $region11: #{tpu_custom_call.1} parent=1 // pred_check_branch
      %22 = sbr.rel (0) target = $region13
    $region12: #{tpu_custom_call.1} parent=1 // pred_region
      _
    $region13: #{tpu_custom_call.1} parent=1 // pred_fallthru
      _
    // Predicated region
    $region14: #{tpu_custom_call.1} parent=1 // pred_check
      _
    $region15: #{tpu_custom_call.1} parent=1 // pred_check_branch
      %24 = sbr.rel (0) target = $region17
    $region16: #{tpu_custom_call.1} parent=1 // pred_region
      _
    $region17: #{tpu_custom_call.1} parent=1 // pred_fallthru
      _
    // Predicated region
    $region18: #{tpu_custom_call.1} parent=1 // pred_check
      _
    $region19: #{tpu_custom_call.1} parent=1 // pred_check_branch
      %26 = sbr.rel (0) target = $region21
    $region20: #{tpu_custom_call.1} parent=1 // pred_region
      _
    $region21: #{tpu_custom_call.1} parent=1 // pred_fallthru
      _
    // Predicated region
    $region22: #{tpu_custom_call.1} parent=1 // pred_check
      _
    $region23: #{tpu_custom_call.1} parent=1 // pred_check_branch
      %28 = sbr.rel (0) target = $region25
    $region24: #{tpu_custom_call.1} parent=1 // pred_region
      _
    $region25: #{tpu_custom_call.1} parent=1 // pred_fallthru
      _
    // Predicated region
    $region26: #{tpu_custom_call.1} parent=1 // pred_check
      _
    $region27: #{tpu_custom_call.1} parent=1 // pred_check_branch
      %30 = sbr.rel (0) target = $region29
    $region28: #{tpu_custom_call.1} parent=1 // pred_region
      _
    $region29: #{tpu_custom_call.1} parent=1 // pred_fallthru
      _
    // Predicated region
    $region30: #{tpu_custom_call.1} parent=1 // pred_check
      _
    $region31: #{tpu_custom_call.1} parent=1 // pred_check_branch
      %32 = sbr.rel (0) target = $region33
    $region32: #{tpu_custom_call.1} parent=1 // pred_region
      _
    $region33: #{tpu_custom_call.1} parent=1 // pred_fallthru
      _
    // Predicated region
    $region34: #{tpu_custom_call.1} parent=1 // pred_check
      _
    $region35: #{tpu_custom_call.1} parent=1 // pred_check_branch
      %34 = sbr.rel (0) target = $region37
    $region36: #{tpu_custom_call.1} parent=1 // pred_region
      _
    $region37: #{tpu_custom_call.1} parent=1 // pred_fallthru
      _
    // Predicated region
    $region38: #{tpu_custom_call.1} parent=1 // pred_check
      _
    $region39: #{tpu_custom_call.1} parent=1 // pred_check_branch
      %36 = sbr.rel (0) target = $region41
    $region40: #{tpu_custom_call.1} parent=1 // pred_region
      _
    $region41: #{tpu_custom_call.1} parent=1 // pred_fallthru
      _
    // Predicated region
    $region42: #{tpu_custom_call.1} parent=1 // pred_check
      _
    $region43: #{tpu_custom_call.1} parent=1 // pred_check_branch
      %38 = sbr.rel (0) target = $region45
    $region44: #{tpu_custom_call.1} parent=1 // pred_region
      _
    $region45: #{tpu_custom_call.1} parent=1 // pred_fallthru
      _
    %v39 = vlaneseq
    %v40 = vshrl.u32 %v39, 7
    %v41 = vadd.s32 %v40, 8
    %v42 = vadd.s32 %v40, 16
    %v43 = vadd.s32 %v40, 24
    %v44 = vld [vmem:[%s2] sm:$0x1]
    %v45 = vlaneseq
    %v46 = vshrl.u32 %v45, 7
    %v47 = vsub.s32 0, %v46
    %v48 = vrot.slane %v44, %v47
    %vm49 = vcmp.eq.s32.totalorder %v40, %v48
    %vm50 = vcmp.eq.s32.totalorder %v41, %v48
    %vm51 = vcmp.eq.s32.totalorder %v42, %v48
    %vm52 = vcmp.eq.s32.totalorder %v43, %v48
    %v53 = vsel %vm49, 1, 0
    %v54 = vsel %vm50, 1, 0
    %v55 = vsel %vm51, 1, 0
    %v56 = vsel %vm52, 1, 0
    %v57 = vcvt.s32.f32 %v53
    %v58 = vcvt.s32.f32 %v54
    %v59 = vcvt.s32.f32 %v55
    %v60 = vcvt.s32.f32 %v56
    %v61 = vlaneseq
    %v62 = vand.u32 %v61, 127
    %v63 = vld [vmem:[%s1] sm:$0xff]
    %v64 = vld [vmem:[%s1 + $0x8] sm:$0xff]
    %v65 = vld [vmem:[%s1 + $0x10] sm:$0xff]
    %v66 = vld [vmem:[%s1 + $0x18] sm:$0xff]
    %v67 = vld [vmem:[%s1 + $0x20] sm:$0xff]
    %v68 = vld [vmem:[%s1 + $0x28] sm:$0xff]
    %v69 = vld [vmem:[%s1 + $0x30] sm:$0xff]
    %v70 = vld [vmem:[%s1 + $0x38] sm:$0xff]
    %71 = vset.pattern.permute.xlu0 0
    %72 = vperm.xlu0 %71, %v63
    %v73 = vpop.permute.xlu0 %72
    %74 = vset.pattern.permute.xlu0 0
    %75 = vperm.xlu0 %74, %v64
    %v76 = vpop.permute.xlu0 %75
    %77 = vset.pattern.permute.xlu0 0
    %78 = vperm.xlu0 %77, %v65
    %v79 = vpop.permute.xlu0 %78
    %80 = vset.pattern.permute.xlu0 0
    %81 = vperm.xlu0 %80, %v66
    %v82 = vpop.permute.xlu0 %81
    %83 = vset.pattern.permute.xlu0 0
    %84 = vperm.xlu0 %83, %v67
    %v85 = vpop.permute.xlu0 %84
    %86 = vset.pattern.permute.xlu0 0
    %87 = vperm.xlu0 %86, %v68
    %v88 = vpop.permute.xlu0 %87
    %89 = vset.pattern.permute.xlu0 0
    %90 = vperm.xlu0 %89, %v69
    %v91 = vpop.permute.xlu0 %90
    %92 = vset.pattern.permute.xlu0 0
    %93 = vperm.xlu0 %92, %v70
    %v94 = vpop.permute.xlu0 %93
    %vm95 = vcmp.eq.s32.totalorder %v62, %v73
    %vm96 = vcmp.eq.s32.totalorder %v62, %v76
    %vm97 = vcmp.eq.s32.totalorder %v62, %v79
    %vm98 = vcmp.eq.s32.totalorder %v62, %v82
    %vm99 = vcmp.eq.s32.totalorder %v62, %v85
    %vm100 = vcmp.eq.s32.totalorder %v62, %v88
    %vm101 = vcmp.eq.s32.totalorder %v62, %v91
    %vm102 = vcmp.eq.s32.totalorder %v62, %v94
    %v103 = vsel %vm95, 1, 0
    %v104 = vsel %vm96, 1, 0
    %v105 = vsel %vm97, 1, 0
    %v106 = vsel %vm98, 1, 0
    %v107 = vsel %vm99, 1, 0
    %v108 = vsel %vm100, 1, 0
    %v109 = vsel %vm101, 1, 0
    %v110 = vsel %vm102, 1, 0
    %v111 = vcvt.s32.f32 %v103
    %v112 = vcvt.s32.f32 %v104
    %v113 = vcvt.s32.f32 %v105
    %v114 = vcvt.s32.f32 %v106
    %v115 = vcvt.s32.f32 %v107
    %v116 = vcvt.s32.f32 %v108
    %v117 = vcvt.s32.f32 %v109
    %v118 = vcvt.s32.f32 %v110
    %v119 = vld [vmem:[%s3] sm:$0x1]
    %v121 = vlaneseq
    %v122 = vshrl.u32 %v121, 7
    %v123 = vsub.s32 0, %v122
    %v124 = vrot.slane %v119, %v123
    %v126 = vmul.f32 %v57, %v124
    %v127 = vmul.f32 %v58, %v124
    %v128 = vmul.f32 %v59, %v124
    %v129 = vmul.f32 %v60, %v124
    %vm130 = vcmp.eq.s32.totalorder %v40, %v62
    %vm131 = vcmp.eq.s32.totalorder %v41, %v62
    %vm132 = vcmp.eq.s32.totalorder %v42, %v62
    %vm133 = vcmp.eq.s32.totalorder %v43, %v62
    %v134 = vsel %vm130, 1, 0
    %v135 = vsel %vm131, 1, 0
    %v136 = vsel %vm132, 1, 0
    %v137 = vsel %vm133, 1, 0
    %v138 = vcvt.s32.f32 %v134
    %v139 = vcvt.s32.f32 %v135
    %v140 = vcvt.s32.f32 %v136
    %v141 = vcvt.s32.f32 %v137
    %vm142 = vcmask 523264
    %v144 = vsel %vm142, %v126, 0
    %v147 = vsel %vm142, %v127, 0
    %v150 = vsel %vm142, %v128, 0
    %v153 = vsel %vm142, %v129, 0
    %155 = vmatprep.subr.mxu0 0.0
    %156 = vmatpush1.msra.mxu0 %v111
    %157 = vmatprep.subr.mxu0 0.0
    %158 = vmatpush1.msra.mxu0 %v112
    %159 = vmatprep.subr.mxu0 0.0
    %160 = vmatpush1.msra.mxu0 %v113
    %161 = vmatprep.subr.mxu0 0.0
    %162 = vmatpush1.msra.mxu0 %v114
    %163 = vmatprep.subr.mxu0 0.0
    %164 = vmatpush1.msra.mxu0 %v115
    %165 = vmatprep.subr.mxu0 0.0
    %166 = vmatpush1.msra.mxu0 %v116
    %167 = vmatprep.subr.mxu0 0.0
    %168 = vmatpush1.msra.mxu0 %v117
    %169 = vmatprep.subr.mxu0 0.0
    %170 = vmatpush1.msra.mxu0 %v118
    %171 = vmatprep.subr.mxu0 0.0
    %172 = vmatpush1.msra.mxu0 0.0
    %173 = vmatprep.subr.mxu0 0.0
    %174 = vmatpush1.msra.mxu0 0.0
    %175 = vmatprep.subr.mxu0 0.0
    %176 = vmatpush1.msra.mxu0 0.0
    %177 = vmatprep.subr.mxu0 0.0
    %178 = vmatpush1.msra.mxu0 0.0
    %179 = vmatprep.subr.mxu0 0.0
    %180 = vmatpush1.msra.mxu0 0.0
    %181 = vmatprep.subr.mxu0 0.0
    %182 = vmatpush1.msra.mxu0 0.0
    %183 = vmatprep.subr.mxu0 0.0
    %184 = vmatpush1.msra.mxu0 0.0
    %185 = vmatprep.subr.mxu0 0.0
    %186 = vmatpush1.msra.mxu0 0.0
    %187 = vmatprep.subr.mxu0 0.0
    %188 = vmatpush1.msra.mxu0 0.0
    %189 = vmatprep.subr.mxu0 0.0
    %190 = vmatpush1.msra.mxu0 0.0
    %191 = vmatprep.subr.mxu0 0.0
    %192 = vmatpush1.msra.mxu0 0.0
    %193 = vmatprep.subr.mxu0 0.0
    %194 = vmatpush1.msra.mxu0 0.0
    %195 = vmatprep.subr.mxu0 0.0
    %196 = vmatpush1.msra.mxu0 0.0
    %197 = vmatprep.subr.mxu0 0.0
    %198 = vmatpush1.msra.mxu0 0.0
    %199 = vmatprep.subr.mxu0 0.0
    %200 = vmatpush1.msra.mxu0 0.0
    %201 = vmatprep.subr.mxu0 0.0
    %202 = vmatpush1.msra.mxu0 0.0
    %203 = vmatprep.subr.mxu0 0.0
    %204 = vmatpush1.msra.mxu0 0.0
    %205 = vmatprep.subr.mxu0 0.0
    %206 = vmatpush1.msra.mxu0 0.0
    %207 = vmatprep.subr.mxu0 0.0
    %208 = vmatpush1.msra.mxu0 0.0
    %209 = vmatprep.subr.mxu0 0.0
    %210 = vmatpush1.msra.mxu0 0.0
    %211 = vmatprep.subr.mxu0 0.0
    %212 = vmatpush1.msra.mxu0 0.0
    %213 = vmatprep.subr.mxu0 0.0
    %214 = vmatpush1.msra.mxu0 0.0
    %215 = vmatprep.subr.mxu0 0.0
    %216 = vmatpush1.msra.mxu0 0.0
    %217 = vmatprep.subr.mxu0 0.0
    %218 = vmatpush1.msra.mxu0 0.0
    %219 = vmatprep.mubr.f32.mxu0 0.0
    %220 = vmatmul.mubr.f32.gmra.mrb[0].mxu0 %v144
    %v221 = vpop.f32.mrb[0].mxu0
    %v222 = vadd.f32 %v138, %v221
    %v223 = vpop.f32.mrb[0].mxu0
    %224 = vmatprep.mubr.f32.mxu0 0.0
    %225 = vmatmul.mubr.f32.gmra.mrb[0].mxu0 %v147
    %v226 = vpop.f32.mrb[0].mxu0
    %v227 = vadd.f32 %v139, %v226
    %v228 = vpop.f32.mrb[0].mxu0
    %229 = vmatprep.mubr.f32.mxu0 0.0
    %230 = vmatmul.mubr.f32.gmra.mrb[0].mxu0 %v150
    %v231 = vpop.f32.mrb[0].mxu0
    %v232 = vadd.f32 %v140, %v231
    %v233 = vpop.f32.mrb[0].mxu0
    %234 = vmatprep.mubr.f32.mxu0 0.0
    %235 = vmatmul.mubr.f32.gmra.mrb[0].mxu0 %v153
    %v236 = vpop.f32.mrb[0].mxu0
    %v237 = vadd.f32 %v141, %v236
    %v238 = vpop.f32.mrb[0].mxu0
    %239 = vdwg.mxu0
    %vm240 = vcmask 261120
    %v241 = vsel %vm240, %v222, 0.0
    %242 = vadd.xlane.f32.xlu0 %v241
    %v243 = vpop.xlane.xlu0 %242
    %v244 = vsel %vm240, %v227, 0.0
    %245 = vadd.xlane.f32.xlu0 %v244
    %v246 = vpop.xlane.xlu0 %245
    %v247 = vsel %vm240, %v232, 0.0
    %248 = vadd.xlane.f32.xlu0 %v247
    %v249 = vpop.xlane.xlu0 %248
    %v250 = vsel %vm240, %v237, 0.0
    %251 = vadd.xlane.f32.xlu0 %v250
    %v252 = vpop.xlane.xlu0 %251
    %vm253 = vcmp.gt.f32.partialorder %v243, 0.0
    %vm254 = vcmp.gt.f32.partialorder %v246, 0.0
    %vm255 = vcmp.gt.f32.partialorder %v249, 0.0
    %vm256 = vcmp.gt.f32.partialorder %v252, 0.0
    %v257 = vrsqrt.pop %v243
    %v258 = vrsqrt.pop %v246
    %v259 = vrsqrt.pop %v249
    %v260 = vrsqrt.pop %v252
    %v261 = vsel %vm253, %v257, 0.0
    %v262 = vsel %vm254, %v258, 0.0
    %v263 = vsel %vm255, %v259, 0.0
    %v264 = vsel %vm256, %v260, 0.0
    %v265 = vld [vmem:[%s0] sm:$0xff]
    %v266 = vld [vmem:[%s0 + $0x8] sm:$0xff]
    %v267 = vld [vmem:[%s0 + $0x10] sm:$0xff]
    %v268 = vld [vmem:[%s0 + $0x18] sm:$0xff]
    %v269 = vmul.f32 %v261, %v265
    %v270 = vmul.f32 %v262, %v266
    %v271 = vmul.f32 %v263, %v267
    %v272 = vmul.f32 %v264, %v268
    %v274 = vsel %vm240, %v222, 0
    %v277 = vsel %vm240, %v227, 0
    %v280 = vsel %vm240, %v232, 0
    %v283 = vsel %vm240, %v237, 0
    %285 = vmatprep.subr.mxu0 0.0
    %286 = vmatpush1.msra.mxu0 %v269
    %287 = vmatprep.subr.mxu0 0.0
    %288 = vmatpush1.msra.mxu0 %v270
    %289 = vmatprep.subr.mxu0 0.0
    %290 = vmatpush1.msra.mxu0 %v271
    %291 = vmatprep.subr.mxu0 0.0
    %292 = vmatpush1.msra.mxu0 %v272
    %293 = vmatprep.subr.mxu0 0.0
    %294 = vmatpush1.msra.mxu0 0.0
    %295 = vmatprep.subr.mxu0 0.0
    %296 = vmatpush1.msra.mxu0 0.0
    %297 = vmatprep.subr.mxu0 0.0
    %298 = vmatpush1.msra.mxu0 0.0
    %299 = vmatprep.subr.mxu0 0.0
    %300 = vmatpush1.msra.mxu0 0.0
    %301 = vmatprep.subr.mxu0 0.0
    %302 = vmatpush1.msra.mxu0 0.0
    %303 = vmatprep.subr.mxu0 0.0
    %304 = vmatpush1.msra.mxu0 0.0
    %305 = vmatprep.subr.mxu0 0.0
    %306 = vmatpush1.msra.mxu0 0.0
    %307 = vmatprep.subr.mxu0 0.0
    %308 = vmatpush1.msra.mxu0 0.0
    %309 = vmatprep.subr.mxu0 0.0
    %310 = vmatpush1.msra.mxu0 0.0
    %311 = vmatprep.subr.mxu0 0.0
    %312 = vmatpush1.msra.mxu0 0.0
    %313 = vmatprep.subr.mxu0 0.0
    %314 = vmatpush1.msra.mxu0 0.0
    %315 = vmatprep.subr.mxu0 0.0
    %316 = vmatpush1.msra.mxu0 0.0
    %317 = vmatprep.subr.mxu0 0.0
    %318 = vmatpush1.msra.mxu0 0.0
    %319 = vmatprep.subr.mxu0 0.0
    %320 = vmatpush1.msra.mxu0 0.0
    %321 = vmatprep.subr.mxu0 0.0
    %322 = vmatpush1.msra.mxu0 0.0
    %323 = vmatprep.subr.mxu0 0.0
    %324 = vmatpush1.msra.mxu0 0.0
    %325 = vmatprep.subr.mxu0 0.0
    %326 = vmatpush1.msra.mxu0 0.0
    %327 = vmatprep.subr.mxu0 0.0
    %328 = vmatpush1.msra.mxu0 0.0
    %329 = vmatprep.subr.mxu0 0.0
    %330 = vmatpush1.msra.mxu0 0.0
    %331 = vmatprep.subr.mxu0 0.0
    %332 = vmatpush1.msra.mxu0 0.0
    %333 = vmatprep.subr.mxu0 0.0
    %334 = vmatpush1.msra.mxu0 0.0
    %335 = vmatprep.subr.mxu0 0.0
    %336 = vmatpush1.msra.mxu0 0.0
    %337 = vmatprep.subr.mxu0 0.0
    %338 = vmatpush1.msra.mxu0 0.0
    %339 = vmatprep.subr.mxu0 0.0
    %340 = vmatpush1.msra.mxu0 0.0
    %341 = vmatprep.subr.mxu0 0.0
    %342 = vmatpush1.msra.mxu0 0.0
    %343 = vmatprep.subr.mxu0 0.0
    %344 = vmatpush1.msra.mxu0 0.0
    %345 = vmatprep.subr.mxu0 0.0
    %346 = vmatpush1.msra.mxu0 0.0
    %347 = vmatprep.subr.mxu0 0.0
    %348 = vmatpush1.msra.mxu0 0.0
    %349 = vmatprep.mubr.f32.mxu0 0.0
    %350 = vmatmul.mubr.f32.gmra.mrb[0].mxu0 %v274
    %v351 = vpop.f32.mrb[0].mxu0
    %v352 = vadd.f32 0.0, %v351
    %v353 = vpop.f32.mrb[0].mxu0
    %354 = vmatprep.mubr.f32.mxu0 0.0
    %355 = vmatmul.mubr.f32.gmra.mrb[0].mxu0 %v277
    %v356 = vpop.f32.mrb[0].mxu0
    %v357 = vadd.f32 0.0, %v356
    %v358 = vpop.f32.mrb[0].mxu0
    %359 = vmatprep.mubr.f32.mxu0 0.0
    %360 = vmatmul.mubr.f32.gmra.mrb[0].mxu0 %v280
    %v361 = vpop.f32.mrb[0].mxu0
    %v362 = vadd.f32 0.0, %v361
    %v363 = vpop.f32.mrb[0].mxu0
    %364 = vmatprep.mubr.f32.mxu0 0.0
    %365 = vmatmul.mubr.f32.gmra.mrb[0].mxu0 %v283
    %v366 = vpop.f32.mrb[0].mxu0
    %v367 = vadd.f32 0.0, %v366
    %v368 = vpop.f32.mrb[0].mxu0
    %369 = vdwg.mxu0
    %v370 = vmul.f32 %v261, %v352
    %v371 = vmul.f32 %v262, %v357
    %v372 = vmul.f32 %v263, %v362
    %v373 = vmul.f32 %v264, %v367
    %v374 = vmul.f32 %v261, %v370
    %v375 = vmul.f32 %v262, %v371
    %v376 = vmul.f32 %v263, %v372
    %v377 = vmul.f32 %v264, %v373
    %378 = vmatprep.subr.mxu0 0.0
    %379 = vmatpush1.msra.mxu0 %v374
    %380 = vmatprep.subr.mxu0 0.0
    %381 = vmatpush1.msra.mxu0 %v375
    %382 = vmatprep.subr.mxu0 0.0
    %383 = vmatpush1.msra.mxu0 %v376
    %384 = vmatprep.subr.mxu0 0.0
    %385 = vmatpush1.msra.mxu0 %v377
    %386 = vmatprep.subr.mxu0 0.0
    %387 = vmatpush1.msra.mxu0 0.0
    %388 = vmatprep.subr.mxu0 0.0
    %389 = vmatpush1.msra.mxu0 0.0
    %390 = vmatprep.subr.mxu0 0.0
    %391 = vmatpush1.msra.mxu0 0.0
    %392 = vmatprep.subr.mxu0 0.0
    %393 = vmatpush1.msra.mxu0 0.0
    %394 = vmatprep.subr.mxu0 0.0
    %395 = vmatpush1.msra.mxu0 0.0
    %396 = vmatprep.subr.mxu0 0.0
    %397 = vmatpush1.msra.mxu0 0.0
    %398 = vmatprep.subr.mxu0 0.0
    %399 = vmatpush1.msra.mxu0 0.0
    %400 = vmatprep.subr.mxu0 0.0
    %401 = vmatpush1.msra.mxu0 0.0
    %402 = vmatprep.subr.mxu0 0.0
    %403 = vmatpush1.msra.mxu0 0.0
    %404 = vmatprep.subr.mxu0 0.0
    %405 = vmatpush1.msra.mxu0 0.0
    %406 = vmatprep.subr.mxu0 0.0
    %407 = vmatpush1.msra.mxu0 0.0
    %408 = vmatprep.subr.mxu0 0.0
    %409 = vmatpush1.msra.mxu0 0.0
    %410 = vmatprep.subr.mxu0 0.0
    %411 = vmatpush1.msra.mxu0 0.0
    %412 = vmatprep.subr.mxu0 0.0
    %413 = vmatpush1.msra.mxu0 0.0
    %414 = vmatprep.subr.mxu0 0.0
    %415 = vmatpush1.msra.mxu0 0.0
    %416 = vmatprep.subr.mxu0 0.0
    %417 = vmatpush1.msra.mxu0 0.0
    %418 = vmatprep.subr.mxu0 0.0
    %419 = vmatpush1.msra.mxu0 0.0
    %420 = vmatprep.subr.mxu0 0.0
    %421 = vmatpush1.msra.mxu0 0.0
    %422 = vmatprep.subr.mxu0 0.0
    %423 = vmatpush1.msra.mxu0 0.0
    %424 = vmatprep.subr.mxu0 0.0
    %425 = vmatpush1.msra.mxu0 0.0
    %426 = vmatprep.subr.mxu0 0.0
    %427 = vmatpush1.msra.mxu0 0.0
    %428 = vmatprep.subr.mxu0 0.0
    %429 = vmatpush1.msra.mxu0 0.0
    %430 = vmatprep.subr.mxu0 0.0
    %431 = vmatpush1.msra.mxu0 0.0
    %432 = vmatprep.subr.mxu0 0.0
    %433 = vmatpush1.msra.mxu0 0.0
    %434 = vmatprep.subr.mxu0 0.0
    %435 = vmatpush1.msra.mxu0 0.0
    %436 = vmatprep.subr.mxu0 0.0
    %437 = vmatpush1.msra.mxu0 0.0
    %438 = vmatprep.subr.mxu0 0.0
    %439 = vmatpush1.msra.mxu0 0.0
    %440 = vmatprep.subr.mxu0 0.0
    %441 = vmatpush1.msra.mxu0 0.0
    %442 = vmatprep.mubr.f32.mxu0 0.0
    %443 = vmatmul.mubr.f32.gmra.mrb[0].mxu0 %v274
    %v444 = vpop.f32.mrb[0].mxu0
    %v445 = vadd.f32 0.0, %v444
    %v446 = vpop.f32.mrb[0].mxu0
    %447 = vmatprep.mubr.f32.mxu0 0.0
    %448 = vmatmul.mubr.f32.gmra.mrb[0].mxu0 %v277
    %v449 = vpop.f32.mrb[0].mxu0
    %v450 = vadd.f32 0.0, %v449
    %v451 = vpop.f32.mrb[0].mxu0
    %452 = vmatprep.mubr.f32.mxu0 0.0
    %453 = vmatmul.mubr.f32.gmra.mrb[0].mxu0 %v280
    %v454 = vpop.f32.mrb[0].mxu0
    %v455 = vadd.f32 0.0, %v454
    %v456 = vpop.f32.mrb[0].mxu0
    %457 = vmatprep.mubr.f32.mxu0 0.0
    %458 = vmatmul.mubr.f32.gmra.mrb[0].mxu0 %v283
    %v459 = vpop.f32.mrb[0].mxu0
    %v460 = vadd.f32 0.0, %v459
    %v461 = vpop.f32.mrb[0].mxu0
    %462 = vdwg.mxu0
    %v463 = vmul.f32 %v261, %v445
    %v464 = vmul.f32 %v262, %v450
    %v465 = vmul.f32 %v263, %v455
    %v466 = vmul.f32 %v264, %v460
    %v467 = vld [vmem:[%s6] sm:$0xff]
    %v468 = vld [vmem:[%s6 + $0x8] sm:$0xff]
    %v469 = vld [vmem:[%s7] sm:$0x1]
    %v471 = vlaneseq
    %v472 = vshrl.u32 %v471, 7
    %v473 = vsub.s32 0, %v472
    %v474 = vrot.slane %v469, %v473
    %vm476 = vcmask 130048
    %v478 = vsel %vm476, %v463, 0
    %v481 = vsel %vm476, %v464, 0
    %v484 = vsel %vm476, %v465, 0
    %v487 = vsel %vm476, %v466, 0
    %489 = vmatprep.subr.mxu0 0.0
    %490 = vmatpush1.msra.mxu0 %v467
    %491 = vmatprep.subr.mxu0 0.0
    %492 = vmatpush1.msra.mxu0 %v468
    %493 = vmatprep.subr.mxu0 0.0
    %494 = vmatpush1.msra.mxu0 0.0
    %495 = vmatprep.subr.mxu0 0.0
    %496 = vmatpush1.msra.mxu0 0.0
    %497 = vmatprep.subr.mxu0 0.0
    %498 = vmatpush1.msra.mxu0 0.0
    %499 = vmatprep.subr.mxu0 0.0
    %500 = vmatpush1.msra.mxu0 0.0
    %501 = vmatprep.subr.mxu0 0.0
    %502 = vmatpush1.msra.mxu0 0.0
    %503 = vmatprep.subr.mxu0 0.0
    %504 = vmatpush1.msra.mxu0 0.0
    %505 = vmatprep.subr.mxu0 0.0
    %506 = vmatpush1.msra.mxu0 0.0
    %507 = vmatprep.subr.mxu0 0.0
    %508 = vmatpush1.msra.mxu0 0.0
    %509 = vmatprep.subr.mxu0 0.0
    %510 = vmatpush1.msra.mxu0 0.0
    %511 = vmatprep.subr.mxu0 0.0
    %512 = vmatpush1.msra.mxu0 0.0
    %513 = vmatprep.subr.mxu0 0.0
    %514 = vmatpush1.msra.mxu0 0.0
    %515 = vmatprep.subr.mxu0 0.0
    %516 = vmatpush1.msra.mxu0 0.0
    %517 = vmatprep.subr.mxu0 0.0
    %518 = vmatpush1.msra.mxu0 0.0
    %519 = vmatprep.subr.mxu0 0.0
    %520 = vmatpush1.msra.mxu0 0.0
    %521 = vmatprep.subr.mxu0 0.0
    %522 = vmatpush1.msra.mxu0 0.0
    %523 = vmatprep.subr.mxu0 0.0
    %524 = vmatpush1.msra.mxu0 0.0
    %525 = vmatprep.subr.mxu0 0.0
    %526 = vmatpush1.msra.mxu0 0.0
    %527 = vmatprep.subr.mxu0 0.0
    %528 = vmatpush1.msra.mxu0 0.0
    %529 = vmatprep.subr.mxu0 0.0
    %530 = vmatpush1.msra.mxu0 0.0
    %531 = vmatprep.subr.mxu0 0.0
    %532 = vmatpush1.msra.mxu0 0.0
    %533 = vmatprep.subr.mxu0 0.0
    %534 = vmatpush1.msra.mxu0 0.0
    %535 = vmatprep.subr.mxu0 0.0
    %536 = vmatpush1.msra.mxu0 0.0
    %537 = vmatprep.subr.mxu0 0.0
    %538 = vmatpush1.msra.mxu0 0.0
    %539 = vmatprep.subr.mxu0 0.0
    %540 = vmatpush1.msra.mxu0 0.0
    %541 = vmatprep.subr.mxu0 0.0
    %542 = vmatpush1.msra.mxu0 0.0
    %543 = vmatprep.subr.mxu0 0.0
    %544 = vmatpush1.msra.mxu0 0.0
    %545 = vmatprep.subr.mxu0 0.0
    %546 = vmatpush1.msra.mxu0 0.0
    %547 = vmatprep.subr.mxu0 0.0
    %548 = vmatpush1.msra.mxu0 0.0
    %549 = vmatprep.subr.mxu0 0.0
    %550 = vmatpush1.msra.mxu0 0.0
    %551 = vmatprep.subr.mxu0 0.0
    %552 = vmatpush1.msra.mxu0 0.0
    %553 = vmatprep.mubr.f32.mxu0 0.0
    %554 = vmatmul.mubr.f32.gmra.mrb[0].mxu0 %v478
    %v555 = vpop.f32.mrb[0].mxu0
    %v556 = vadd.f32 %v474, %v555
    %v557 = vpop.f32.mrb[0].mxu0
    %558 = vmatprep.mubr.f32.mxu0 0.0
    %559 = vmatmul.mubr.f32.gmra.mrb[0].mxu0 %v481
    %v560 = vpop.f32.mrb[0].mxu0
    %v561 = vadd.f32 %v474, %v560
    %v562 = vpop.f32.mrb[0].mxu0
    %563 = vmatprep.mubr.f32.mxu0 0.0
    %564 = vmatmul.mubr.f32.gmra.mrb[0].mxu0 %v484
    %v565 = vpop.f32.mrb[0].mxu0
    %v566 = vadd.f32 %v474, %v565
    %v567 = vpop.f32.mrb[0].mxu0
    %568 = vmatprep.mubr.f32.mxu0 0.0
    %569 = vmatmul.mubr.f32.gmra.mrb[0].mxu0 %v487
    %v570 = vpop.f32.mrb[0].mxu0
    %v571 = vadd.f32 %v474, %v570
    %v572 = vpop.f32.mrb[0].mxu0
    %573 = vdwg.mxu0
    %vm574 = vcmp.gt.f32.partialorder %v556, 0.0
    %vm575 = vcmp.gt.f32.partialorder %v561, 0.0
    %vm576 = vcmp.gt.f32.partialorder %v566, 0.0
    %vm577 = vcmp.gt.f32.partialorder %v571, 0.0
    %v578 = vld [vmem:[%s8] sm:$0x1]
    %v580 = vlaneseq
    %v581 = vshrl.u32 %v580, 7
    %v582 = vsub.s32 0, %v581
    %v583 = vrot.slane %v578, %v582
    %v585 = vmul.f32 %v583, %v556
    %v586 = vmul.f32 %v583, %v561
    %v587 = vmul.f32 %v583, %v566
    %v588 = vmul.f32 %v583, %v571
    %v589 = vsel %vm574, %v556, %v585
    %v590 = vsel %vm575, %v561, %v586
    %v591 = vsel %vm576, %v566, %v587
    %v592 = vsel %vm577, %v571, %v588
    %v593 = vsel %vm240, %v589, 0.0
    %v594 = vsel %vm240, %v590, 0.0
    %v595 = vadd.f32 %v593, %v594
    %v596 = vsel %vm240, %v591, 0.0
    %v597 = vadd.f32 %v595, %v596
    %v598 = vsel %vm240, %v592, 0.0
    %v599 = vadd.f32 %v597, %v598
    %v600 = vrot.slane %v599, 4
    %v601 = vadd.f32 %v599, %v600
    %v602 = vrot.slane %v601, 2
    %v603 = vadd.f32 %v601, %v602
    %v604 = vrot.slane %v603, 1
    %v605 = vadd.f32 %v603, %v604
    %v606 = vrcp.pop 32.0
    %v607 = vmul.f32 %v605, %v606
    %v608 = vsub.f32 %v589, %v607
    %v609 = vsub.f32 %v590, %v607
    %v610 = vsub.f32 %v591, %v607
    %v611 = vsub.f32 %v592, %v607
    %v612 = vmul.f32 %v608, %v608
    %v613 = vmul.f32 %v609, %v609
    %v614 = vmul.f32 %v610, %v610
    %v615 = vmul.f32 %v611, %v611
    %v616 = vsel %vm240, %v612, 0.0
    %v617 = vsel %vm240, %v613, 0.0
    %v618 = vadd.f32 %v616, %v617
    %v619 = vsel %vm240, %v614, 0.0
    %v620 = vadd.f32 %v618, %v619
    %v621 = vsel %vm240, %v615, 0.0
    %v622 = vadd.f32 %v620, %v621
    %v623 = vrot.slane %v622, 4
    %v624 = vadd.f32 %v622, %v623
    %v625 = vrot.slane %v624, 2
    %v626 = vadd.f32 %v624, %v625
    %v627 = vrot.slane %v626, 1
    %v628 = vadd.f32 %v626, %v627
    %v629 = vmul.f32 %v628, %v606
    %v630 = vadd.f32 %v629, 1e-05
    %v631 = vrsqrt.pop %v630
    %v632 = vmul.f32 %v608, %v631
    %v633 = vmul.f32 %v609, %v631
    %v634 = vmul.f32 %v610, %v631
    %v635 = vmul.f32 %v611, %v631
    %v636 = vld [vmem:[%s9] sm:$0x1]
    %v638 = vlaneseq
    %v639 = vshrl.u32 %v638, 7
    %v640 = vsub.s32 0, %v639
    %v641 = vrot.slane %v636, %v640
    %v643 = vmul.f32 %v632, %v641
    %v644 = vmul.f32 %v633, %v641
    %v645 = vmul.f32 %v634, %v641
    %v646 = vmul.f32 %v635, %v641
    %v647 = vld [vmem:[%s10] sm:$0x1]
    %v649 = vlaneseq
    %v650 = vshrl.u32 %v649, 7
    %v651 = vsub.s32 0, %v650
    %v652 = vrot.slane %v647, %v651
    %v654 = vadd.f32 %v643, %v652
    %v655 = vadd.f32 %v644, %v652
    %v656 = vadd.f32 %v645, %v652
    %v657 = vadd.f32 %v646, %v652
    %v658 = vld [vmem:[%s4] sm:$0x1]
    %v659 = vlaneseq
    %v660 = vshrl.u32 %v659, 7
    %v661 = vsub.s32 0, %v660
    %v662 = vrot.slane %v658, %v661
    %vm663 = vcmp.eq.s32.totalorder %v40, %v662
    %v664 = vsel %vm663, 1, 0
    %v665 = vcvt.s32.f32 %v664
    %vm666 = vcmask 257024
    %v667 = vsel %vm666, %v665, 0.0
    %668 = vadd.xlane.f32.xlu0 %v667
    %v669 = vpop.xlane.xlu0 %668
    %v670 = vmax.f32 %v669, 1.0
    %v672 = vsel %vm240, %v665, 0
    %674 = vmatprep.subr.mxu0 0.0
    %675 = vmatpush1.msra.mxu0 %v654
    %676 = vmatprep.subr.mxu0 0.0
    %677 = vmatpush1.msra.mxu0 %v655
    %678 = vmatprep.subr.mxu0 0.0
    %679 = vmatpush1.msra.mxu0 %v656
    %680 = vmatprep.subr.mxu0 0.0
    %681 = vmatpush1.msra.mxu0 %v657
    %682 = vmatprep.subr.mxu0 0.0
    %683 = vmatpush1.msra.mxu0 0.0
    %684 = vmatprep.subr.mxu0 0.0
    %685 = vmatpush1.msra.mxu0 0.0
    %686 = vmatprep.subr.mxu0 0.0
    %687 = vmatpush1.msra.mxu0 0.0
    %688 = vmatprep.subr.mxu0 0.0
    %689 = vmatpush1.msra.mxu0 0.0
    %690 = vmatprep.subr.mxu0 0.0
    %691 = vmatpush1.msra.mxu0 0.0
    %692 = vmatprep.subr.mxu0 0.0
    %693 = vmatpush1.msra.mxu0 0.0
    %694 = vmatprep.subr.mxu0 0.0
    %695 = vmatpush1.msra.mxu0 0.0
    %696 = vmatprep.subr.mxu0 0.0
    %697 = vmatpush1.msra.mxu0 0.0
    %698 = vmatprep.subr.mxu0 0.0
    %699 = vmatpush1.msra.mxu0 0.0
    %700 = vmatprep.subr.mxu0 0.0
    %701 = vmatpush1.msra.mxu0 0.0
    %702 = vmatprep.subr.mxu0 0.0
    %703 = vmatpush1.msra.mxu0 0.0
    %704 = vmatprep.subr.mxu0 0.0
    %705 = vmatpush1.msra.mxu0 0.0
    %706 = vmatprep.subr.mxu0 0.0
    %707 = vmatpush1.msra.mxu0 0.0
    %708 = vmatprep.subr.mxu0 0.0
    %709 = vmatpush1.msra.mxu0 0.0
    %710 = vmatprep.subr.mxu0 0.0
    %711 = vmatpush1.msra.mxu0 0.0
    %712 = vmatprep.subr.mxu0 0.0
    %713 = vmatpush1.msra.mxu0 0.0
    %714 = vmatprep.subr.mxu0 0.0
    %715 = vmatpush1.msra.mxu0 0.0
    %716 = vmatprep.subr.mxu0 0.0
    %717 = vmatpush1.msra.mxu0 0.0
    %718 = vmatprep.subr.mxu0 0.0
    %719 = vmatpush1.msra.mxu0 0.0
    %720 = vmatprep.subr.mxu0 0.0
    %721 = vmatpush1.msra.mxu0 0.0
    %722 = vmatprep.subr.mxu0 0.0
    %723 = vmatpush1.msra.mxu0 0.0
    %724 = vmatprep.subr.mxu0 0.0
    %725 = vmatpush1.msra.mxu0 0.0
    %726 = vmatprep.subr.mxu0 0.0
    %727 = vmatpush1.msra.mxu0 0.0
    %728 = vmatprep.subr.mxu0 0.0
    %729 = vmatpush1.msra.mxu0 0.0
    %730 = vmatprep.subr.mxu0 0.0
    %731 = vmatpush1.msra.mxu0 0.0
    %732 = vmatprep.subr.mxu0 0.0
    %733 = vmatpush1.msra.mxu0 0.0
    %734 = vmatprep.subr.mxu0 0.0
    %735 = vmatpush1.msra.mxu0 0.0
    %736 = vmatprep.subr.mxu0 0.0
    %737 = vmatpush1.msra.mxu0 0.0
    %738 = vmatprep.mubr.f32.mxu0 0.0
    %739 = vmatmul.mubr.f32.gmra.mrb[0].mxu0 %v672
    %v740 = vpop.f32.mrb[0].mxu0
    %v741 = vadd.f32 0.0, %v740
    %v742 = vpop.f32.mrb[0].mxu0
    %743 = vdwg.mxu0
    %v744 = vrcp.pop %v670
    %v745 = vmul.f32 %v741, %v744
    %v746 = vld [vmem:[%s5] sm:$0xff]
    %v747 = vld [vmem:[%s5 + $0x8] sm:$0xff]
    %v748 = vld [vmem:[%s5 + $0x10] sm:$0xff]
    %v749 = vld [vmem:[%s5 + $0x18] sm:$0xff]
    %vm750 = vcmp.eq.s32.totalorder %v746, 0
    %vm751 = vcmp.eq.s32.totalorder %v747, 0
    %vm752 = vcmp.eq.s32.totalorder %v748, 0
    %vm753 = vcmp.eq.s32.totalorder %v749, 0
    %v754 = vsel %vm750, 1, 0
    %v755 = vsel %vm751, 1, 0
    %v756 = vsel %vm752, 1, 0
    %v757 = vsel %vm753, 1, 0
    %758 = vset.pattern.permute.xlu0 0
    %759 = vperm.xlu0 %758, %v754
    %v760 = vpop.permute.xlu0 %759
    %761 = vset.pattern.permute.xlu0 0
    %762 = vperm.xlu0 %761, %v755
    %v763 = vpop.permute.xlu0 %762
    %764 = vset.pattern.permute.xlu0 0
    %765 = vperm.xlu0 %764, %v756
    %v766 = vpop.permute.xlu0 %765
    %767 = vset.pattern.permute.xlu0 0
    %768 = vperm.xlu0 %767, %v757
    %v769 = vpop.permute.xlu0 %768
    %vm770 = vcmp.eq.s32.totalorder %v760, 1
    %vm771 = vcmp.eq.s32.totalorder %v763, 1
    %vm772 = vcmp.eq.s32.totalorder %v766, 1
    %vm773 = vcmp.eq.s32.totalorder %v769, 1
    %v774 = vsel %vm770, %v654, -3.4028235e+38
    %v775 = vsel %vm771, %v655, -3.4028235e+38
    %v776 = vsel %vm772, %v656, -3.4028235e+38
    %v777 = vsel %vm773, %v657, -3.4028235e+38
    %v778 = vsel %vm240, %v774, -inf
    %v779 = vsel %vm240, %v775, -inf
    %v780 = vsel %vm240, %v776, -inf
    %v781 = vsel %vm240, %v777, -inf
    %v782 = vmax.f32 %v778, %v779
    %v783 = vmax.f32 %v780, %v781
    %v784 = vmax.f32 %v782, %v783
    %v785 = vrot.slane %v784, 4
    %v786 = vmax.f32 %v784, %v785
    %v787 = vrot.slane %v786, 2
    %v788 = vmax.f32 %v786, %v787
    %v789 = vrot.slane %v788, 1
    %v790 = vmax.f32 %v788, %v789
    %vm791 = vcmp.eq.s32.totalorder %v746, 1
    %vm792 = vcmp.eq.s32.totalorder %v747, 1
    %vm793 = vcmp.eq.s32.totalorder %v748, 1
    %vm794 = vcmp.eq.s32.totalorder %v749, 1
    %v795 = vsel %vm791, 1, 0
    %v796 = vsel %vm792, 1, 0
    %v797 = vsel %vm793, 1, 0
    %v798 = vsel %vm794, 1, 0
    %799 = vset.pattern.permute.xlu0 0
    %800 = vperm.xlu0 %799, %v795
    %v801 = vpop.permute.xlu0 %800
    %802 = vset.pattern.permute.xlu0 0
    %803 = vperm.xlu0 %802, %v796
    %v804 = vpop.permute.xlu0 %803
    %805 = vset.pattern.permute.xlu0 0
    %806 = vperm.xlu0 %805, %v797
    %v807 = vpop.permute.xlu0 %806
    %808 = vset.pattern.permute.xlu0 0
    %809 = vperm.xlu0 %808, %v798
    %v810 = vpop.permute.xlu0 %809
    %vm811 = vcmp.eq.s32.totalorder %v801, 1
    %vm812 = vcmp.eq.s32.totalorder %v804, 1
    %vm813 = vcmp.eq.s32.totalorder %v807, 1
    %vm814 = vcmp.eq.s32.totalorder %v810, 1
    %v815 = vsel %vm811, %v654, -3.4028235e+38
    %v816 = vsel %vm812, %v655, -3.4028235e+38
    %v817 = vsel %vm813, %v656, -3.4028235e+38
    %v818 = vsel %vm814, %v657, -3.4028235e+38
    %v819 = vsel %vm240, %v815, -inf
    %v820 = vsel %vm240, %v816, -inf
    %v821 = vsel %vm240, %v817, -inf
    %v822 = vsel %vm240, %v818, -inf
    %v823 = vmax.f32 %v819, %v820
    %v824 = vmax.f32 %v821, %v822
    %v825 = vmax.f32 %v823, %v824
    %v826 = vrot.slane %v825, 4
    %v827 = vmax.f32 %v825, %v826
    %v828 = vrot.slane %v827, 2
    %v829 = vmax.f32 %v827, %v828
    %v830 = vrot.slane %v829, 1
    %v831 = vmax.f32 %v829, %v830
    %vm832 = vcmp.eq.s32.totalorder %v746, 2
    %vm833 = vcmp.eq.s32.totalorder %v747, 2
    %vm834 = vcmp.eq.s32.totalorder %v748, 2
    %vm835 = vcmp.eq.s32.totalorder %v749, 2
    %v836 = vsel %vm832, 1, 0
    %v837 = vsel %vm833, 1, 0
    %v838 = vsel %vm834, 1, 0
    %v839 = vsel %vm835, 1, 0
    %840 = vset.pattern.permute.xlu0 0
    %841 = vperm.xlu0 %840, %v836
    %v842 = vpop.permute.xlu0 %841
    %843 = vset.pattern.permute.xlu0 0
    %844 = vperm.xlu0 %843, %v837
    %v845 = vpop.permute.xlu0 %844
    %846 = vset.pattern.permute.xlu0 0
    %847 = vperm.xlu0 %846, %v838
    %v848 = vpop.permute.xlu0 %847
    %849 = vset.pattern.permute.xlu0 0
    %850 = vperm.xlu0 %849, %v839
    %v851 = vpop.permute.xlu0 %850
    %vm852 = vcmp.eq.s32.totalorder %v842, 1
    %vm853 = vcmp.eq.s32.totalorder %v845, 1
    %vm854 = vcmp.eq.s32.totalorder %v848, 1
    %vm855 = vcmp.eq.s32.totalorder %v851, 1
    %v856 = vsel %vm852, %v654, -3.4028235e+38
    %v857 = vsel %vm853, %v655, -3.4028235e+38
    %v858 = vsel %vm854, %v656, -3.4028235e+38
    %v859 = vsel %vm855, %v657, -3.4028235e+38
    %v860 = vsel %vm240, %v856, -inf
    %v861 = vsel %vm240, %v857, -inf
    %v862 = vsel %vm240, %v858, -inf
    %v863 = vsel %vm240, %v859, -inf
    %v864 = vmax.f32 %v860, %v861
    %v865 = vmax.f32 %v862, %v863
    %v866 = vmax.f32 %v864, %v865
    %v867 = vrot.slane %v866, 4
    %v868 = vmax.f32 %v866, %v867
    %v869 = vrot.slane %v868, 2
    %v870 = vmax.f32 %v868, %v869
    %v871 = vrot.slane %v870, 1
    %v872 = vmax.f32 %v870, %v871
    %vm873 = vcmp.eq.s32.totalorder %v746, 3
    %vm874 = vcmp.eq.s32.totalorder %v747, 3
    %vm875 = vcmp.eq.s32.totalorder %v748, 3
    %vm876 = vcmp.eq.s32.totalorder %v749, 3
    %v877 = vsel %vm873, 1, 0
    %v878 = vsel %vm874, 1, 0
    %v879 = vsel %vm875, 1, 0
    %v880 = vsel %vm876, 1, 0
    %881 = vset.pattern.permute.xlu0 0
    %882 = vperm.xlu0 %881, %v877
    %v883 = vpop.permute.xlu0 %882
    %884 = vset.pattern.permute.xlu0 0
    %885 = vperm.xlu0 %884, %v878
    %v886 = vpop.permute.xlu0 %885
    %887 = vset.pattern.permute.xlu0 0
    %888 = vperm.xlu0 %887, %v879
    %v889 = vpop.permute.xlu0 %888
    %890 = vset.pattern.permute.xlu0 0
    %891 = vperm.xlu0 %890, %v880
    %v892 = vpop.permute.xlu0 %891
    %vm893 = vcmp.eq.s32.totalorder %v883, 1
    %vm894 = vcmp.eq.s32.totalorder %v886, 1
    %vm895 = vcmp.eq.s32.totalorder %v889, 1
    %vm896 = vcmp.eq.s32.totalorder %v892, 1
    %v897 = vsel %vm893, %v654, -3.4028235e+38
    %v898 = vsel %vm894, %v655, -3.4028235e+38
    %v899 = vsel %vm895, %v656, -3.4028235e+38
    %v900 = vsel %vm896, %v657, -3.4028235e+38
    %v901 = vsel %vm240, %v897, -inf
    %v902 = vsel %vm240, %v898, -inf
    %v903 = vsel %vm240, %v899, -inf
    %v904 = vsel %vm240, %v900, -inf
    %v905 = vmax.f32 %v901, %v902
    %v906 = vmax.f32 %v903, %v904
    %v907 = vmax.f32 %v905, %v906
    %v908 = vrot.slane %v907, 4
    %v909 = vmax.f32 %v907, %v908
    %v910 = vrot.slane %v909, 2
    %v911 = vmax.f32 %v909, %v910
    %v912 = vrot.slane %v911, 1
    %v913 = vmax.f32 %v911, %v912
    %vm914 = vcmask 1040384
    %v915 = vsel %vm914, %v790, %v831
    %vm916 = vcmask 1041408
    %v917 = vsel %vm916, %v915, %v872
    %vm918 = vcmask 1042432
    %v919 = vsel %vm918, %v917, %v913
    %921 = vrot.lane.b32.xlu0 %v919, 32
    %v922 = vpop.permute.xlu0 %921
    %v924 = vsel %vm240, %v745, %v922
    %vm925 = vcmask 519168
    %926 = vst.msk [vmem:[#allocation2] sm:$0xf] %vm925, %v924
    // Predicated region
    $region46: #{tpu_custom_call.1} parent=1 // pred_check
      _
    $region47: #{tpu_custom_call.1} parent=1 // pred_check_branch
      %928 = sbr.rel (0) target = $region49
    $region48: #{tpu_custom_call.1} parent=1 // pred_region
      %s930 = ssub.s32 64, 64
      %931 = vsyncadd [#allocation3], %s930
      %s933 = sshll.u32 [#allocation2], 4
      %s934 = int_to_ptr.vmem [resolvable:$true] %s933
      %936 = dma.vmem_to_hbm [thread:$0]  %s934, 64, %s11, [#allocation3]
    $region49: #{tpu_custom_call.1} parent=1 // pred_fallthru
      _
    // Predicated region
    $region50: #{tpu_custom_call.1} parent=1 // pred_check
      _
    $region51: #{tpu_custom_call.1} parent=1 // pred_check_branch
      %938 = sbr.rel (0) target = $region53
    $region52: #{tpu_custom_call.1} parent=1 // pred_region
      %939 = dma.done [#allocation3], 64
    $region53: #{tpu_custom_call.1} parent=1 // pred_fallthru
      _
    %940 = vsyncpa [#allocation3], 1

</llo_original>
